<compile_context>
chip_gen: v5e
topology: v5e:2x2
jax: 0.10.0
libtpu: 0.0.40
codegen_flags: <defaults>
</compile_context>

<pallas_src>
import functools

import jax
import jax.numpy as jnp
from jax.experimental import pallas as pl
from jax.experimental.pallas import tpu as pltpu


def _round_up(x, m):
    return (x + m - 1) // m * m


def _cm_attention_kernel(val_ref, w_ref, vec_ref, out_ref, *,
                         text_pad, emb_pad, out_pad, emb_real):
    """value tile (block_b, text_pad) -> output tile (block_b, out_pad)."""
    f32 = jnp.float32

    # Packed weight slab: [ Wt@(I+Wv@Wo) | gamma*Wout ] along lanes.
    w_in = w_ref[0:text_pad, 0:emb_pad]                    # (text_pad, emb_pad)
    w_out = w_ref[0:emb_pad, emb_pad:emb_pad + out_pad]    # (emb_pad, out_pad)

    # Packed bias/mask slab: one sublane per vector, single (8, 128) tile.
    b_pre = vec_ref[0:1, 0:emb_pad]    # fused pre-LN bias (0 on padded lanes)
    b_out = vec_ref[1:2, 0:out_pad]    # beta@Wout + bout
    mask = vec_ref[2:3, 0:emb_pad]     # 1 on real emb lanes, 0 on padded lanes

    # Fused text->emb projection + attention value/out projection + residual.
    x = jnp.dot(val_ref[...], w_in, preferred_element_type=f32) + b_pre

    # LayerNorm core over the *real* emb width.  Padded lanes of x are exactly
    # zero (zero-padded fused weight/bias), so the full-lane sum with a
    # real-width divisor gives the exact mean; the lane mask zeroes padded
    # lanes of (x - mean) so the centered variance is exact and >= 0.
    inv_e = 1.0 / float(emb_real)
    mean = jnp.sum(x, axis=-1, keepdims=True) * inv_e
    d = (x - mean) * mask
    var = jnp.sum(d * d, axis=-1, keepdims=True) * inv_e
    norm = d * jax.lax.rsqrt(var + 1e-5)

    # gamma/beta were folded into w_out / b_out offline.
    out_ref[...] = jnp.dot(norm, w_out, preferred_element_type=f32) + b_out


def cross_modal_attention_va(query, key, value, params, *, num_heads=4,
                             block_b=None):
    """Forward pass of CrossModalAttentionVA.  Returns (1, B, text_dim).

    query / key / num_heads are accepted for API parity with the PyTorch
    module but cannot affect the output: the module unsqueezes to seq_len=1,
    and softmax over a single key is exactly 1, so attention reduces to the
    identity on the projected value.  They are never shipped to the kernel.
    """
    del query, key, num_heads
    assert value.ndim == 2, "expected (batch, text_dim) value features"
    B, text_dim = value.shape
    emb = params["wt"].shape[1]
    out_dim = params["wout"].shape[1]

    f32 = jnp.float32
    text_pad = _round_up(text_dim, 128)
    emb_pad = _round_up(emb, 128)
    out_pad = _round_up(out_dim, 128)

    # One big lane-dense batch tile (cap 512 rows).  VMEM is never the
    # constraint at these widths, even on v7x's 64 MiB; at B > 512 the grid
    # naturally has >= 2 "parallel" steps for megacore sharding.
    if block_b is None:
        block_b = min(_round_up(B, 8), 512)
    else:
        block_b = _round_up(max(int(block_b), 8), 8)
    b_pad = _round_up(max(B, block_b), block_b)

    def pad2(a, rows, cols):
        a = jnp.asarray(a, f32)
        return jnp.pad(a, ((0, rows - a.shape[0]), (0, cols - a.shape[1])))

    # ---- Offline fusion (exact algebra, done once in the wrapper) ----------
    wt = jnp.asarray(params["wt"], f32)        # (text, emb)
    wv = jnp.asarray(params["wv"], f32)        # (emb, emb)
    wo = jnp.asarray(params["wo"], f32)        # (emb, emb)
    wout = jnp.asarray(params["wout"], f32)    # (emb, text)
    bt = jnp.asarray(params["bt"], f32).reshape(1, -1)
    bv = jnp.asarray(params["bv"], f32).reshape(1, -1)
    bo = jnp.asarray(params["bo"], f32).reshape(1, -1)
    gamma = jnp.asarray(params["gamma"], f32).reshape(-1)
    beta = jnp.asarray(params["beta"], f32).reshape(1, -1)
    bout = jnp.asarray(params["bout"], f32).reshape(1, -1)

    w2 = jnp.eye(emb, dtype=f32) + wv @ wo               # I + Wv@Wo
    w_in = wt @ w2                                       # (text, emb)
    b_pre = bt @ w2 + bv @ wo + bo                       # (1, emb)
    w_out_f = gamma[:, None] * wout                      # diag(gamma)@Wout
    b_out_f = beta @ wout + bout                         # (1, text)

    # Packed weight slab: [ w_in | w_out_f ] along lanes, zero-padded.
    slab_rows = max(text_pad, emb_pad)
    w_slab = jnp.zeros((slab_rows, emb_pad + out_pad), f32)
    w_slab = w_slab.at[:text_pad, 0:emb_pad].set(pad2(w_in, text_pad, emb_pad))
    w_slab = w_slab.at[:emb_pad, emb_pad:].set(pad2(w_out_f, emb_pad, out_pad))

    # Packed bias/mask slab: a single (8, 128*k) tile, one vector per sublane.
    vec_w = max(emb_pad, out_pad)
    vec_slab = jnp.zeros((8, vec_w), f32)
    vec_slab = vec_slab.at[0, :emb].set(b_pre.reshape(-1))
    vec_slab = vec_slab.at[1, :out_dim].set(b_out_f.reshape(-1))
    vec_slab = vec_slab.at[2, :emb].set(jnp.ones((emb,), f32))

    val_p = jnp.pad(jnp.asarray(value, f32),
                    ((0, b_pad - B), (0, text_pad - text_dim)))

    kernel = functools.partial(_cm_attention_kernel, text_pad=text_pad,
                               emb_pad=emb_pad, out_pad=out_pad, emb_real=emb)

    out = pl.pallas_call(
        kernel,
        out_shape=jax.ShapeDtypeStruct((b_pad, out_pad), f32),
        grid_spec=pltpu.PrefetchScalarGridSpec(
            num_scalar_prefetch=0,
            grid=(b_pad // block_b,),
            in_specs=[
                pl.BlockSpec((block_b, text_pad), lambda i: (i, 0)),
                pl.BlockSpec(w_slab.shape, lambda i: (0, 0)),
                pl.BlockSpec(vec_slab.shape, lambda i: (0, 0)),
            ],
            out_specs=pl.BlockSpec((block_b, out_pad), lambda i: (i, 0)),
        ),
        compiler_params=pltpu.CompilerParams(
            dimension_semantics=("parallel",)),
    )(val_p, w_slab, vec_slab)

    # PyTorch module returns (1, B, text_dim) — the seq dim is never squeezed.
    return out[:B, :out_dim].reshape(1, B, out_dim)


def init_params(rng, text_dim, va_dim, emb_dim):
    """Deterministic synthetic parameters (PyTorch Linear weights are (out,in);
    stored here pre-transposed to (in,out) for x @ W)."""
    ks = jax.random.split(rng, 12)
    s = 0.05

    def w(k, out_d, in_d):   # returns transposed weight (in, out)
        return (jax.random.normal(k, (out_d, in_d), jnp.float32) * s).T

    def b(k, out_d):
        return jax.random.normal(k, (1, out_d), jnp.float32) * s

    return {
        "wva": w(ks[0], emb_dim, va_dim),   "bva": b(ks[1], emb_dim),
        "wt":  w(ks[2], emb_dim, text_dim), "bt":  b(ks[3], emb_dim),
        "wq":  w(ks[4], emb_dim, emb_dim),  "bq":  b(ks[5], emb_dim),
        "wk":  w(ks[6], emb_dim, emb_dim),  "bk":  b(ks[5], emb_dim) * 0.5,
        "wv":  w(ks[7], emb_dim, emb_dim),  "bv":  b(ks[5], emb_dim) * 0.25,
        "wo":  w(ks[8], emb_dim, emb_dim),  "bo":  b(ks[9], emb_dim),
        "gamma": jnp.ones((1, emb_dim), jnp.float32),
        "beta":  jnp.zeros((1, emb_dim), jnp.float32),
        "wout": w(ks[10], text_dim, emb_dim), "bout": b(ks[11], text_dim),
    }


def reference(query, key, value, P, *, num_heads):
    """Pure-JAX reimplementation of the FULL PyTorch forward (including the
    Q/K/softmax path) for validation of the reduced kernel."""
    q_emb = query @ P["wva"] + P["bva"]
    k_emb = key @ P["wt"] + P["bt"]
    v_emb = value @ P["wt"] + P["bt"]
    Q = q_emb @ P["wq"] + P["bq"]
    K = k_emb @ P["wk"] + P["bk"]
    V = v_emb @ P["wv"] + P["bv"]
    B, E = Q.shape
    Dh = E // num_heads
    scale = 1.0 / (Dh ** 0.5)
    Qh = Q.reshape(B, num_heads, Dh)
    Kh = K.reshape(B, num_heads, Dh)
    Vh = V.reshape(B, num_heads, Dh)
    s = (Qh * Kh).sum(-1) * scale                  # (B, H), single key
    w = jax.nn.softmax(s[..., None], axis=-1)      # softmax over 1 key -> 1
    attn = (w * Vh).reshape(B, E)
    attn_out = attn @ P["wo"] + P["bo"]
    x = v_emb + attn_out
    mean = x.mean(-1, keepdims=True)
    var = ((x - mean) ** 2).mean(-1, keepdims=True)
    y = (x - mean) / jnp.sqrt(var + 1e-5) * P["gamma"] + P["beta"]
    out = y @ P["wout"] + P["bout"]
    return out.reshape(1, B, -1)


if __name__ == "__main__":
    TEXT_DIM, VA_DIM, EMB_DIM, NUM_HEADS = 32, 48, 64, 4
    B = 16

    root = jax.random.PRNGKey(0)
    k_p, k_q, k_k, k_v = jax.random.split(root, 4)
    params = init_params(k_p, TEXT_DIM, VA_DIM, EMB_DIM)

    query = jax.random.normal(k_q, (B, VA_DIM), jnp.float32)   # visual/audio feats
    key = jax.random.normal(k_k, (B, TEXT_DIM), jnp.float32)   # text feats
    value = jax.random.normal(k_v, (B, TEXT_DIM), jnp.float32)

    out = cross_modal_attention_va(query, key, value, params,
                                   num_heads=NUM_HEADS)
    out = jax.block_until_ready(out)

    ref = reference(query, key, value, params, num_heads=NUM_HEADS)
    assert out.shape == (1, B, TEXT_DIM), out.shape
    assert jnp.allclose(out, ref, atol=1e-4, rtol=1e-4), \
        float(jnp.max(jnp.abs(out - ref)))

    print("KERNEL_OK")
</pallas_src>

<mosaic_0001>
module attributes {stable_mosaic.version = 11 : i64} {
  func.func @_cm_attention_kernel(%arg0: i32, %arg1: memref<16x128xf32, #tpu.memory_space<vmem>>, %arg2: memref<128x256xf32, #tpu.memory_space<vmem>>, %arg3: memref<8x128xf32, #tpu.memory_space<vmem>>, %arg4: memref<16x128xf32, #tpu.memory_space<vmem>>) attributes {dimension_semantics = [#tpu.dimension_semantics<parallel>], iteration_bounds = array<i64: 1>, scalar_prefetch = 0 : i64, scratch_operands = 0 : i64, tpu.core_type = #tpu.core_type<tc>, window_params = [{transform_indices = @transform_0, window_bounds = array<i64: 16, 128>}, {pipeline_mode = #tpu.pipeline_mode<synchronous>, transform_indices = @transform_1, window_bounds = array<i64: 128, 256>}, {pipeline_mode = #tpu.pipeline_mode<synchronous>, transform_indices = @transform_2, window_bounds = array<i64: 8, 128>}, {transform_indices = @transform_3, window_bounds = array<i64: 16, 128>}]} {
    %c0 = arith.constant 0 : index
    %c0_0 = arith.constant 0 : index
    %0 = vector.load %arg2[%c0, %c0_0] : memref<128x256xf32, #tpu.memory_space<vmem>>, vector<128x128xf32>
    %c0_1 = arith.constant 0 : index
    %c128 = arith.constant 128 : index
    %1 = vector.load %arg2[%c0_1, %c128] : memref<128x256xf32, #tpu.memory_space<vmem>>, vector<128x128xf32>
    %c0_2 = arith.constant 0 : index
    %c0_3 = arith.constant 0 : index
    %2 = vector.load %arg3[%c0_2, %c0_3] : memref<8x128xf32, #tpu.memory_space<vmem>>, vector<1x128xf32>
    %c1 = arith.constant 1 : index
    %c0_4 = arith.constant 0 : index
    %3 = vector.load %arg3[%c1, %c0_4] : memref<8x128xf32, #tpu.memory_space<vmem>>, vector<1x128xf32>
    %c2 = arith.constant 2 : index
    %c0_5 = arith.constant 0 : index
    %4 = vector.load %arg3[%c2, %c0_5] : memref<8x128xf32, #tpu.memory_space<vmem>>, vector<1x128xf32>
    %c0_6 = arith.constant 0 : index
    %c0_7 = arith.constant 0 : index
    %5 = vector.load %arg1[%c0_6, %c0_7] : memref<16x128xf32, #tpu.memory_space<vmem>>, vector<16x128xf32>
    %cst = arith.constant dense<0.000000e+00> : vector<16x128xf32>
    %6 = tpu.matmul %5, %0, %cst {dimension_numbers = #tpu.dot_dimension_numbers<[1], [0], [0], [1], [0, 0, 1, 1], [], []>} : vector<16x128xf32>, vector<128x128xf32>, vector<16x128xf32> -> vector<16x128xf32>
    %7 = vector.broadcast %2 : vector<1x128xf32> to vector<16x128xf32>
    %8 = arith.addf %6, %7 : vector<16x128xf32>
    %cst_8 = arith.constant dense<0.000000e+00> : vector<16xf32>
    %9 = vector.multi_reduction <add>, %8, %cst_8 [1] : vector<16x128xf32> to vector<16xf32>
    %10 = vector.shape_cast %9 : vector<16xf32> to vector<16x1xf32>
    %cst_9 = arith.constant 1.562500e-02 : f32
    %11 = vector.broadcast %cst_9 : f32 to vector<16x1xf32>
    %12 = arith.mulf %10, %11 : vector<16x1xf32>
    %13 = vector.broadcast %12 : vector<16x1xf32> to vector<16x128xf32>
    %14 = arith.subf %8, %13 : vector<16x128xf32>
    %15 = vector.broadcast %4 : vector<1x128xf32> to vector<16x128xf32>
    %16 = arith.mulf %14, %15 : vector<16x128xf32>
    %17 = arith.mulf %16, %16 : vector<16x128xf32>
    %cst_10 = arith.constant dense<0.000000e+00> : vector<16xf32>
    %18 = vector.multi_reduction <add>, %17, %cst_10 [1] : vector<16x128xf32> to vector<16xf32>
    %19 = vector.shape_cast %18 : vector<16xf32> to vector<16x1xf32>
    %cst_11 = arith.constant 1.562500e-02 : f32
    %20 = vector.broadcast %cst_11 : f32 to vector<16x1xf32>
    %21 = arith.mulf %19, %20 : vector<16x1xf32>
    %cst_12 = arith.constant 9.99999974E-6 : f32
    %22 = vector.broadcast %cst_12 : f32 to vector<16x1xf32>
    %23 = arith.addf %21, %22 : vector<16x1xf32>
    %24 = math.rsqrt %23 : vector<16x1xf32>
    %25 = vector.broadcast %24 : vector<16x1xf32> to vector<16x128xf32>
    %26 = arith.mulf %16, %25 : vector<16x128xf32>
    %cst_13 = arith.constant dense<0.000000e+00> : vector<16x128xf32>
    %27 = tpu.matmul %26, %1, %cst_13 {dimension_numbers = #tpu.dot_dimension_numbers<[1], [0], [0], [1], [0, 0, 1, 1], [], []>} : vector<16x128xf32>, vector<128x128xf32>, vector<16x128xf32> -> vector<16x128xf32>
    %28 = vector.broadcast %3 : vector<1x128xf32> to vector<16x128xf32>
    %29 = arith.addf %27, %28 : vector<16x128xf32>
    %c0_14 = arith.constant 0 : index
    %c0_15 = arith.constant 0 : index
    %30 = vector.load %arg4[%c0_14, %c0_15] : memref<16x128xf32, #tpu.memory_space<vmem>>, vector<16x128xf32>
    tpu.vector_store %arg4[%c0_14, %c0_15], %29 {strides = array<i32>} : memref<16x128xf32, #tpu.memory_space<vmem>>, vector<16x128xf32>,
    return
  }
  func.func @transform_0(%arg0: i32) -> (i32, i32) {
    %c0_i32 = arith.constant 0 : i32
    %c0_i32_0 = arith.constant 0 : i32
    return %arg0, %c0_i32 : i32, i32
  }
  func.func @transform_1(%arg0: i32) -> (i32, i32) {
    %c0_i32 = arith.constant 0 : i32
    %c0_i32_0 = arith.constant 0 : i32
    %c0_i32_1 = arith.constant 0 : i32
    return %c0_i32, %c0_i32_0 : i32, i32
  }
  func.func @transform_2(%arg0: i32) -> (i32, i32) {
    %c0_i32 = arith.constant 0 : i32
    %c0_i32_0 = arith.constant 0 : i32
    %c0_i32_1 = arith.constant 0 : i32
    return %c0_i32, %c0_i32_0 : i32, i32
  }
  func.func @transform_3(%arg0: i32) -> (i32, i32) {
    %c0_i32 = arith.constant 0 : i32
    %c0_i32_0 = arith.constant 0 : i32
    return %arg0, %c0_i32 : i32, i32
  }
}

</mosaic_0001>

<llo_original>
// kernel: tpu_custom_call.1
$region0: #{tpu_custom_call.1}
  #allocation0 [shape = 'u32[]', space=smem, size = 0x4, offset = 0x4, fixed_abs, tag = 'smem constant byte address 0x4 - core index']
  #allocation1 [shape = 'u32[72,128]{1,0:T(1,128)}', space=vmem, size = 0x9000, scoped, tag = 'internal scratch']
  %s0 = inlined_call_operand.hbm [shape: f32[16,128], index: 0, kind: input, shape index: {}]
  %s1 = inlined_call_operand.hbm [shape: f32[128,256], index: 1, kind: input, shape index: {}]
  %s2 = inlined_call_operand.hbm [shape: f32[8,128], index: 2, kind: input, shape index: {}]
  %s3 = inlined_call_operand.hbm [shape: f32[16,128], index: 3, kind: output, shape index: {}]
  %s4 = sld [smem:[#allocation0]]
  $region34: #{tpu_custom_call.1} parent=0
    _
  %s6 = ssub.s32 1, %s4
  %s7 = scalar_select 0, %s6, %s4
  $region1: #{tpu_custom_call.1} parent=0
    #allocation2 [shape = 'u8[8192]{0}', space=vmem, size = 0x2000, scoped, tag = 'input window, operand 0, single buffered']
    #allocation3 [shape = 's32[1]{0}', space=sflag, size = 0x4, scoped, tag = 'scoped memory for tpu_custom_call.1']
    #allocation4 [shape = 's32[1]{0}', space=sflag, size = 0x4, scoped, tag = 'scoped memory for tpu_custom_call.1']
    #allocation5 [shape = 'u8[131072]{0}', space=vmem, size = 0x20000, scoped, tag = 'input window, operand 1, single buffered']
    #allocation6 [shape = 's32[1]{0}', space=sflag, size = 0x4, scoped, tag = 'scoped memory for tpu_custom_call.1']
    #allocation7 [shape = 'u8[4096]{0}', space=vmem, size = 0x1000, scoped, tag = 'input window, operand 2, single buffered']
    #allocation8 [shape = 'u8[8192]{0}', space=vmem, size = 0x2000, scoped, tag = 'output window, operand 0, single buffered']
    %8 = vsyncpa [#allocation3], 0
    %9 = vsyncpa [#allocation6], 0
    %10 = vsyncpa [#allocation4], 0
    // Predicated region
    $region2: #{tpu_custom_call.1} parent=1 // pred_check
      _
    $region3: #{tpu_custom_call.1} parent=1 // pred_check_branch
      %12 = sbr.rel (0) target = $region5
    $region4: #{tpu_custom_call.1} parent=1 // pred_region
      %14 = vsyncadd [#allocation3], 0
      %s15 = sshll.u32 %s0, 4
      %s16 = int_to_ptr.hbm [resolvable:$true] %s15
      %s17 = sshll.u32 [#allocation2], 4
      %s18 = int_to_ptr.vmem [resolvable:$true] %s17
      %23 = dma.hbm_to_vmem [thread:$0]  %s16, 256, %s18, [#allocation3], 128, 128, 8
    $region5: #{tpu_custom_call.1} parent=1 // pred_fallthru
      _
    // Predicated region
    $region6: #{tpu_custom_call.1} parent=1 // pred_check
      _
    $region7: #{tpu_custom_call.1} parent=1 // pred_check_branch
      %25 = sbr.rel (0) target = $region9
    $region8: #{tpu_custom_call.1} parent=1 // pred_region
      %27 = vsyncadd [#allocation6], 0
      %s28 = sshll.u32 %s1, 4
      %s29 = int_to_ptr.hbm [resolvable:$true] %s28
      %s30 = sshll.u32 [#allocation5], 4
      %s31 = int_to_ptr.vmem [resolvable:$true] %s30
      %36 = dma.hbm_to_vmem [thread:$0]  %s29, 4096, %s31, [#allocation6], 256, 256, 16
    $region9: #{tpu_custom_call.1} parent=1 // pred_fallthru
      _
    // Predicated region
    $region10: #{tpu_custom_call.1} parent=1 // pred_check
      _
    $region11: #{tpu_custom_call.1} parent=1 // pred_check_branch
      %38 = sbr.rel (0) target = $region13
    $region12: #{tpu_custom_call.1} parent=1 // pred_region
      %40 = vsyncadd [#allocation6], 0
      %s42 = sshll.u32 %s2, 4
      %s43 = int_to_ptr.hbm [resolvable:$true] %s42
      %s44 = sshll.u32 [#allocation7], 4
      %s45 = int_to_ptr.vmem [resolvable:$true] %s44
      %47 = dma.hbm_to_vmem [thread:$0]  %s43, 128, %s45, [#allocation6]
    $region13: #{tpu_custom_call.1} parent=1 // pred_fallthru
      _
    // Predicated region
    $region14: #{tpu_custom_call.1} parent=1 // pred_check
      _
    $region15: #{tpu_custom_call.1} parent=1 // pred_check_branch
      %49 = sbr.rel (0) target = $region17
    $region16: #{tpu_custom_call.1} parent=1 // pred_region
      %51 = dma.done [#allocation3], 256
    $region17: #{tpu_custom_call.1} parent=1 // pred_fallthru
      _
    // Predicated region
    $region18: #{tpu_custom_call.1} parent=1 // pred_check
      _
    $region19: #{tpu_custom_call.1} parent=1 // pred_check_branch
      %53 = sbr.rel (0) target = $region21
    $region20: #{tpu_custom_call.1} parent=1 // pred_region
      %55 = dma.done [#allocation6], 4096
    $region21: #{tpu_custom_call.1} parent=1 // pred_fallthru
      _
    // Predicated region
    $region22: #{tpu_custom_call.1} parent=1 // pred_check
      _
    $region23: #{tpu_custom_call.1} parent=1 // pred_check_branch
      %57 = sbr.rel (0) target = $region25
    $region24: #{tpu_custom_call.1} parent=1 // pred_region
      %59 = dma.done [#allocation6], 128
    $region25: #{tpu_custom_call.1} parent=1 // pred_fallthru
      _
    %v60 = vld [vmem:[#allocation5] sm:$0xff]
    %v61 = vld [vmem:[#allocation5 + $0x10] sm:$0xff]
    %v62 = vld [vmem:[#allocation5 + $0x20] sm:$0xff]
    %v63 = vld [vmem:[#allocation5 + $0x30] sm:$0xff]
    %v64 = vld [vmem:[#allocation5 + $0x40] sm:$0xff]
    %v65 = vld [vmem:[#allocation5 + $0x50] sm:$0xff]
    %v66 = vld [vmem:[#allocation5 + $0x60] sm:$0xff]
    %v67 = vld [vmem:[#allocation5 + $0x70] sm:$0xff]
    %v68 = vld [vmem:[#allocation5 + $0x80] sm:$0xff]
    %v69 = vld [vmem:[#allocation5 + $0x90] sm:$0xff]
    %v70 = vld [vmem:[#allocation5 + $0xa0] sm:$0xff]
    %v71 = vld [vmem:[#allocation5 + $0xb0] sm:$0xff]
    %v72 = vld [vmem:[#allocation5 + $0xc0] sm:$0xff]
    %v73 = vld [vmem:[#allocation5 + $0xd0] sm:$0xff]
    %v74 = vld [vmem:[#allocation5 + $0xe0] sm:$0xff]
    %v75 = vld [vmem:[#allocation5 + $0xf0] sm:$0xff]
    %v76 = vld [vmem:[#allocation5 + $0x8] sm:$0xff]
    %v77 = vld [vmem:[#allocation5 + $0x18] sm:$0xff]
    %v78 = vld [vmem:[#allocation5 + $0x28] sm:$0xff]
    %v79 = vld [vmem:[#allocation5 + $0x38] sm:$0xff]
    %v80 = vld [vmem:[#allocation5 + $0x48] sm:$0xff]
    %v81 = vld [vmem:[#allocation5 + $0x58] sm:$0xff]
    %v82 = vld [vmem:[#allocation5 + $0x68] sm:$0xff]
    %v83 = vld [vmem:[#allocation5 + $0x78] sm:$0xff]
    %v84 = vld [vmem:[#allocation5 + $0x88] sm:$0xff]
    %v85 = vld [vmem:[#allocation5 + $0x98] sm:$0xff]
    %v86 = vld [vmem:[#allocation5 + $0xa8] sm:$0xff]
    %v87 = vld [vmem:[#allocation5 + $0xb8] sm:$0xff]
    %v88 = vld [vmem:[#allocation5 + $0xc8] sm:$0xff]
    %v89 = vld [vmem:[#allocation5 + $0xd8] sm:$0xff]
    %v90 = vld [vmem:[#allocation5 + $0xe8] sm:$0xff]
    %v91 = vld [vmem:[#allocation5 + $0xf8] sm:$0xff]
    %v92 = vld [vmem:[#allocation7] sm:$0x1]
    %v93 = vld [vmem:[#allocation7 + $0x1] sm:$0x1]
    %v94 = vld [vmem:[#allocation7 + $0x2] sm:$0x1]
    %v95 = vld [vmem:[#allocation2] sm:$0xff]
    %v96 = vld [vmem:[#allocation2 + $0x8] sm:$0xff]
    %v97 = vperm.slane %v92, 0
    %98 = vmatpush.msra.mxu0 %v75
    %99 = vmatpush.msra.mxu0 %v74
    %100 = vmatpush.msra.mxu0 %v73
    %101 = vmatpush.msra.mxu0 %v72
    %102 = vmatpush.msra.mxu0 %v71
    %103 = vmatpush.msra.mxu0 %v70
    %104 = vmatpush.msra.mxu0 %v69
    %105 = vmatpush.msra.mxu0 %v68
    %106 = vmatpush.msra.mxu0 %v67
    %107 = vmatpush.msra.mxu0 %v66
    %108 = vmatpush.msra.mxu0 %v65
    %109 = vmatpush.msra.mxu0 %v64
    %110 = vmatpush.msra.mxu0 %v63
    %111 = vmatpush.msra.mxu0 %v62
    %112 = vmatpush.msra.mxu0 %v61
    %113 = vmatpush.msra.mxu0 %v60
    %114 = vmatmul.f32.gmra.mxu0 %v95
    %v115 = vpop.f32.mrf.mxu0
    %v116 = vadd.f32 %v97, %v115
    %117 = vmatmul.f32.gmra.mxu0 %v96
    %v118 = vpop.f32.mrf.mxu0
    %v119 = vadd.f32 %v97, %v118
    %120 = vdwg.mxu0
    %121 = vadd.xlane.f32.xlu0 %v116
    %v122 = vpop.xlane.xlu0 %121
    %123 = vadd.xlane.f32.xlu0 %v119
    %v124 = vpop.xlane.xlu0 %123
    %v125 = vmul.f32 %v122, 0.015625
    %v126 = vmul.f32 %v124, 0.015625
    %v127 = vsub.f32 %v116, %v125
    %v128 = vsub.f32 %v119, %v126
    %v129 = vperm.slane %v94, 0
    %v130 = vmul.f32 %v127, %v129
    %v131 = vmul.f32 %v128, %v129
    %v132 = vmul.f32 %v130, %v130
    %v133 = vmul.f32 %v131, %v131
    %134 = vadd.xlane.f32.xlu0 %v132
    %v135 = vpop.xlane.xlu0 %134
    %136 = vadd.xlane.f32.xlu0 %v133
    %v137 = vpop.xlane.xlu0 %136
    %v138 = vmul.f32 %v135, 0.015625
    %v139 = vmul.f32 %v137, 0.015625
    %v140 = vadd.f32 %v138, 1e-05
    %v141 = vadd.f32 %v139, 1e-05
    %v142 = vrsqrt.pop %v140
    %v143 = vmul.f32 %v142, %v140
    %v144 = vmul.f32 %v143, %v142
    %v145 = vmul.f32 0.5, %v144
    %v146 = vsub.f32 1.5, %v145
    %v147 = vmul.f32 %v142, %v146
    %vm148 = vweird.f32 %v140
    %vm149 = vweird.f32 %v142
    %vm150 = vmor %vm148, %vm149
    %v151 = vsel %vm150, %v142, %v147
    %v152 = vrsqrt.pop %v141
    %v153 = vmul.f32 %v152, %v141
    %v154 = vmul.f32 %v153, %v152
    %v155 = vmul.f32 0.5, %v154
    %v156 = vsub.f32 1.5, %v155
    %v157 = vmul.f32 %v152, %v156
    %vm158 = vweird.f32 %v141
    %vm159 = vweird.f32 %v152
    %vm160 = vmor %vm158, %vm159
    %v161 = vsel %vm160, %v152, %v157
    %v162 = vmul.f32 %v130, %v151
    %v163 = vmul.f32 %v131, %v161
    %v164 = vperm.slane %v93, 0
    %165 = vmatpush.msra.mxu0 %v91
    %166 = vmatpush.msra.mxu0 %v90
    %167 = vmatpush.msra.mxu0 %v89
    %168 = vmatpush.msra.mxu0 %v88
    %169 = vmatpush.msra.mxu0 %v87
    %170 = vmatpush.msra.mxu0 %v86
    %171 = vmatpush.msra.mxu0 %v85
    %172 = vmatpush.msra.mxu0 %v84
    %173 = vmatpush.msra.mxu0 %v83
    %174 = vmatpush.msra.mxu0 %v82
    %175 = vmatpush.msra.mxu0 %v81
    %176 = vmatpush.msra.mxu0 %v80
    %177 = vmatpush.msra.mxu0 %v79
    %178 = vmatpush.msra.mxu0 %v78
    %179 = vmatpush.msra.mxu0 %v77
    %180 = vmatpush.msra.mxu0 %v76
    %181 = vmatmul.f32.gmra.mxu0 %v162
    %v182 = vpop.f32.mrf.mxu0
    %v183 = vadd.f32 %v164, %v182
    %184 = vmatmul.f32.gmra.mxu0 %v163
    %v185 = vpop.f32.mrf.mxu0
    %v186 = vadd.f32 %v164, %v185
    %187 = vdwg.mxu0
    %188 = vst [vmem:[#allocation8] sm:$0xff] %v183
    %189 = vst [vmem:[#allocation8 + $0x8] sm:$0xff] %v186
    // Predicated region
    $region26: #{tpu_custom_call.1} parent=1 // pred_check
      _
    $region27: #{tpu_custom_call.1} parent=1 // pred_check_branch
      %191 = sbr.rel (0) target = $region29
    $region28: #{tpu_custom_call.1} parent=1 // pred_region
      %193 = vsyncadd [#allocation4], 0
      %s194 = sshll.u32 [#allocation8], 4
      %s195 = int_to_ptr.vmem [resolvable:$true] %s194
      %s196 = sshll.u32 %s3, 4
      %s197 = int_to_ptr.hbm [resolvable:$true] %s196
      %202 = dma.vmem_to_hbm [thread:$0]  %s195, 256, %s197, [#allocation4], 128, 128, 8
    $region29: #{tpu_custom_call.1} parent=1 // pred_fallthru
      _
    // Predicated region
    $region30: #{tpu_custom_call.1} parent=1 // pred_check
      _
    $region31: #{tpu_custom_call.1} parent=1 // pred_check_branch
      %204 = sbr.rel (0) target = $region33
    $region32: #{tpu_custom_call.1} parent=1 // pred_region
      %206 = dma.done [#allocation4], 256
    $region33: #{tpu_custom_call.1} parent=1 // pred_fallthru
      _
    %207 = vsyncpa [#allocation3], 1
    %208 = vsyncpa [#allocation6], 1
    %209 = vsyncpa [#allocation4], 1

</llo_original>
